<compile_context>
chip_gen: v6e
topology: v6e:2x2x1
jax: 0.10.0
libtpu: 0.0.40
codegen_flags: <defaults>
</compile_context>

<pallas_src>
import functools

import jax
import jax.numpy as jnp
from jax.experimental import pallas as pl
from jax.experimental.pallas import tpu as pltpu

_LANE = 128
_SUBLANE = 16  # multiple of 8; keeps bf16 inputs sublane-aligned too


def _dice_kernel(x_ref, t_ref, out_ref, inter_acc, den_acc, *, n, tm):
    i = pl.program_id(0)

    @pl.when(i == 0)
    def _():
        inter_acc[...] = jnp.zeros_like(inter_acc)
        den_acc[...] = jnp.zeros_like(den_acc)

    x = x_ref[...].astype(jnp.float32)
    t = t_ref[...].astype(jnp.float32)

    # sigmoid(x) == 0.5 * (tanh(0.5 * x) + 1): one EUP transcendental instead
    # of exp + reciprocal.
    sig = 0.5 * (jnp.tanh(0.5 * x) + 1.0)

    # Mask the tail (alignment padding and/or the partial last block) using
    # the global flat element index, so pad values never contribute.
    row = jax.lax.broadcasted_iota(jnp.int32, x.shape, 0)
    col = jax.lax.broadcasted_iota(jnp.int32, x.shape, 1)
    gidx = (i * tm + row) * _LANE + col
    valid = gidx < n
    sig = jnp.where(valid, sig, 0.0)
    t = jnp.where(valid, t, 0.0)

    # Pure element-wise accumulation in VMEM; co-issues with the input DMA.
    inter_acc[...] += sig * t       # sum(sigmoid(x) * t)
    den_acc[...] += sig + t         # sum(sigmoid(x)) + sum(t), folded

    @pl.when(i == pl.num_programs(0) - 1)
    def _():
        # Single cross-lane/sublane reduction at the very end.
        out_ref[0] = jnp.sum(inter_acc[...])
        out_ref[1] = jnp.sum(den_acc[...])


def dice_loss(inputs, targets, smooth=1.0, *, tm=1024):
    """Pallas implementation of DiceLoss.forward (returns a scalar f32)."""
    # Keep native dtypes: the kernel widens in-vreg, so bf16 inputs stream at
    # half the HBM bytes.
    x = inputs.reshape(-1)
    t = targets.reshape(-1)
    n = x.shape[0]

    # Pad only when the flat size is not (16*128)-aligned; pad value is
    # irrelevant because the kernel masks on the true element count n.
    align = _SUBLANE * _LANE
    n_pad = pl.cdiv(n, align) * align
    pad = n_pad - n
    if pad:
        x = jnp.pad(x, (0, pad))
        t = jnp.pad(t, (0, pad))

    rows = n_pad // _LANE
    tile_rows = min(int(tm), rows)          # both are multiples of _SUBLANE
    grid = (pl.cdiv(rows, tile_rows),)

    x2 = x.reshape(rows, _LANE)
    t2 = t.reshape(rows, _LANE)

    out = pl.pallas_call(
        functools.partial(_dice_kernel, n=n, tm=tile_rows),
        out_shape=jax.ShapeDtypeStruct((2,), jnp.float32),
        grid_spec=pltpu.PrefetchScalarGridSpec(
            num_scalar_prefetch=0,
            grid=grid,
            in_specs=[
                pl.BlockSpec((tile_rows, _LANE), lambda i: (i, 0)),
                pl.BlockSpec((tile_rows, _LANE), lambda i: (i, 0)),
            ],
            out_specs=pl.BlockSpec(memory_space=pltpu.MemorySpace.SMEM),
            scratch_shapes=[
                pltpu.VMEM((tile_rows, _LANE), jnp.float32),  # intersection
                pltpu.VMEM((tile_rows, _LANE), jnp.float32),  # denominator
            ],
        ),
        compiler_params=pltpu.CompilerParams(
            dimension_semantics=("arbitrary",),
        ),
    )(x2, t2)

    inter = out[0]
    den = out[1]
    smooth = float(smooth)
    return 1.0 - (2.0 * inter + smooth) / (den + smooth)


def _reference_dice_loss(inputs, targets, smooth=1.0):
    x = jax.nn.sigmoid(inputs.astype(jnp.float32)).reshape(-1)
    t = targets.reshape(-1).astype(jnp.float32)
    inter = jnp.sum(x * t)
    dice = (2.0 * inter + smooth) / (jnp.sum(x) + jnp.sum(t) + smooth)
    return 1.0 - dice


if __name__ == "__main__":
    key = jax.random.PRNGKey(0)
    k1, k2 = jax.random.split(key)

    # NCHW logits and binary targets, matching the PyTorch module's usage.
    x = jax.random.normal(k1, (2, 4, 16, 16), dtype=jnp.float32)
    targets = (jax.random.uniform(k2, (2, 4, 16, 16)) > 0.5).astype(jnp.float32)

    loss = dice_loss(x, targets, smooth=1)
    loss = jax.block_until_ready(loss)

    ref = _reference_dice_loss(x, targets, smooth=1.0)
    assert jnp.allclose(loss, ref, atol=1e-5, rtol=1e-5), (loss, ref)

    print("KERNEL_OK")
</pallas_src>

<mosaic_0001>
module attributes {stable_mosaic.version = 11 : i64} {
  func.func @_dice_kernel(%arg0: i32, %arg1: memref<16x128xf32, #tpu.memory_space<vmem>>, %arg2: memref<16x128xf32, #tpu.memory_space<vmem>>, %arg3: memref<2xf32, #tpu.memory_space<smem>>, %arg4: memref<16x128xf32, #tpu.memory_space<vmem>>, %arg5: memref<16x128xf32, #tpu.memory_space<vmem>>) attributes {dimension_semantics = [#tpu.dimension_semantics<arbitrary>], iteration_bounds = array<i64: 1>, scalar_prefetch = 0 : i64, scratch_operands = 2 : i64, tpu.core_type = #tpu.core_type<tc>, window_params = [{transform_indices = @transform_0, window_bounds = array<i64: 16, 128>}, {transform_indices = @transform_1, window_bounds = array<i64: 16, 128>}, {transform_indices = @transform_2, window_bounds = array<i64: 2>}]} {
    %c0_i32 = arith.constant 0 : i32
    %0 = arith.cmpi eq, %arg0, %c0_i32 : i32
    %1 = arith.extui %0 : i1 to i32
    %c0_i32_0 = arith.constant 0 : i32
    %2 = arith.cmpi ne, %1, %c0_i32_0 : i32
    scf.if %2 {
      %cst_18 = arith.constant 0.000000e+00 : f32
      %37 = vector.broadcast %cst_18 : f32 to vector<16x128xf32>
      %c0_19 = arith.constant 0 : index
      %c0_20 = arith.constant 0 : index
      %38 = vector.load %arg4[%c0_19, %c0_20] : memref<16x128xf32, #tpu.memory_space<vmem>>, vector<16x128xf32>
      tpu.vector_store %arg4[%c0_19, %c0_20], %37 {strides = array<i32>} : memref<16x128xf32, #tpu.memory_space<vmem>>, vector<16x128xf32>,
      %cst_21 = arith.constant 0.000000e+00 : f32
      %39 = vector.broadcast %cst_21 : f32 to vector<16x128xf32>
      %c0_22 = arith.constant 0 : index
      %c0_23 = arith.constant 0 : index
      %40 = vector.load %arg5[%c0_22, %c0_23] : memref<16x128xf32, #tpu.memory_space<vmem>>, vector<16x128xf32>
      tpu.vector_store %arg5[%c0_22, %c0_23], %39 {strides = array<i32>} : memref<16x128xf32, #tpu.memory_space<vmem>>, vector<16x128xf32>,
    } else {
    }
    %c0 = arith.constant 0 : index
    %c0_1 = arith.constant 0 : index
    %3 = vector.load %arg1[%c0, %c0_1] : memref<16x128xf32, #tpu.memory_space<vmem>>, vector<16x128xf32>
    %c0_2 = arith.constant 0 : index
    %c0_3 = arith.constant 0 : index
    %4 = vector.load %arg2[%c0_2, %c0_3] : memref<16x128xf32, #tpu.memory_space<vmem>>, vector<16x128xf32>
    %cst = arith.constant 5.000000e-01 : f32
    %5 = vector.broadcast %cst : f32 to vector<16x128xf32>
    %6 = arith.mulf %5, %3 : vector<16x128xf32>
    %7 = math.tanh %6 : vector<16x128xf32>
    %cst_4 = arith.constant 1.000000e+00 : f32
    %8 = vector.broadcast %cst_4 : f32 to vector<16x128xf32>
    %9 = arith.addf %7, %8 : vector<16x128xf32>
    %cst_5 = arith.constant 5.000000e-01 : f32
    %10 = vector.broadcast %cst_5 : f32 to vector<16x128xf32>
    %11 = arith.mulf %10, %9 : vector<16x128xf32>
    %12 = tpu.iota {dimensions = array<i32: 0>} : vector<16x128xi32>
    %13 = tpu.iota {dimensions = array<i32: 1>} : vector<16x128xi32>
    %c16_i32 = arith.constant 16 : i32
    %14 = arith.muli %arg0, %c16_i32 : i32
    %15 = vector.broadcast %14 : i32 to vector<16x128xi32>
    %16 = arith.addi %15, %12 : vector<16x128xi32>
    %c128_i32 = arith.constant 128 : i32
    %17 = vector.broadcast %c128_i32 : i32 to vector<16x128xi32>
    %18 = arith.muli %16, %17 : vector<16x128xi32>
    %19 = arith.addi %18, %13 : vector<16x128xi32>
    %c2048_i32 = arith.constant 2048 : i32
    %20 = vector.broadcast %c2048_i32 : i32 to vector<16x128xi32>
    %21 = arith.cmpi slt, %19, %20 : vector<16x128xi32>
    %cst_6 = arith.constant 0.000000e+00 : f32
    %22 = vector.broadcast %cst_6 : f32 to vector<16x128xf32>
    %23 = arith.select %21, %11, %22 : vector<16x128xi1>, vector<16x128xf32>
    %cst_7 = arith.constant 0.000000e+00 : f32
    %24 = vector.broadcast %cst_7 : f32 to vector<16x128xf32>
    %25 = arith.select %21, %4, %24 : vector<16x128xi1>, vector<16x128xf32>
    %c0_8 = arith.constant 0 : index
    %c0_9 = arith.constant 0 : index
    %26 = vector.load %arg4[%c0_8, %c0_9] : memref<16x128xf32, #tpu.memory_space<vmem>>, vector<16x128xf32>
    %27 = arith.mulf %23, %25 : vector<16x128xf32>
    %28 = arith.addf %26, %27 : vector<16x128xf32>
    %c0_10 = arith.constant 0 : index
    %c0_11 = arith.constant 0 : index
    %29 = vector.load %arg4[%c0_10, %c0_11] : memref<16x128xf32, #tpu.memory_space<vmem>>, vector<16x128xf32>
    tpu.vector_store %arg4[%c0_10, %c0_11], %28 {strides = array<i32>} : memref<16x128xf32, #tpu.memory_space<vmem>>, vector<16x128xf32>,
    %c0_12 = arith.constant 0 : index
    %c0_13 = arith.constant 0 : index
    %30 = vector.load %arg5[%c0_12, %c0_13] : memref<16x128xf32, #tpu.memory_space<vmem>>, vector<16x128xf32>
    %31 = arith.addf %23, %25 : vector<16x128xf32>
    %32 = arith.addf %30, %31 : vector<16x128xf32>
    %c0_14 = arith.constant 0 : index
    %c0_15 = arith.constant 0 : index
    %33 = vector.load %arg5[%c0_14, %c0_15] : memref<16x128xf32, #tpu.memory_space<vmem>>, vector<16x128xf32>
    tpu.vector_store %arg5[%c0_14, %c0_15], %32 {strides = array<i32>} : memref<16x128xf32, #tpu.memory_space<vmem>>, vector<16x128xf32>,
    %c0_i32_16 = arith.constant 0 : i32
    %34 = arith.cmpi eq, %arg0, %c0_i32_16 : i32
    %35 = arith.extui %34 : i1 to i32
    %c0_i32_17 = arith.constant 0 : i32
    %36 = arith.cmpi ne, %35, %c0_i32_17 : i32
    scf.if %36 {
      %c0_18 = arith.constant 0 : index
      %c0_19 = arith.constant 0 : index
      %37 = vector.load %arg4[%c0_18, %c0_19] : memref<16x128xf32, #tpu.memory_space<vmem>>, vector<16x128xf32>
      %38 = vector.shape_cast %37 : vector<16x128xf32> to vector<1x16x128xf32>
      %cst_20 = arith.constant dense<0.000000e+00> : vector<1xf32>
      %39 = vector.multi_reduction <add>, %38, %cst_20 [1, 2] : vector<1x16x128xf32> to vector<1xf32>
      %40 = vector.shape_cast %39 : vector<1xf32> to vector<1x1x1xf32>
      %41 = vector.extract %40[0, 0, 0] : f32 from vector<1x1x1xf32>
      %c0_21 = arith.constant 0 : index
      %42 = memref.load %arg3[%c0_21] : memref<2xf32, #tpu.memory_space<smem>>
      memref.store %41, %arg3[%c0_21] : memref<2xf32, #tpu.memory_space<smem>>
      %c0_22 = arith.constant 0 : index
      %c0_23 = arith.constant 0 : index
      %43 = vector.load %arg5[%c0_22, %c0_23] : memref<16x128xf32, #tpu.memory_space<vmem>>, vector<16x128xf32>
      %44 = vector.shape_cast %43 : vector<16x128xf32> to vector<1x16x128xf32>
      %cst_24 = arith.constant dense<0.000000e+00> : vector<1xf32>
      %45 = vector.multi_reduction <add>, %44, %cst_24 [1, 2] : vector<1x16x128xf32> to vector<1xf32>
      %46 = vector.shape_cast %45 : vector<1xf32> to vector<1x1x1xf32>
      %47 = vector.extract %46[0, 0, 0] : f32 from vector<1x1x1xf32>
      %c1 = arith.constant 1 : index
      %48 = memref.load %arg3[%c1] : memref<2xf32, #tpu.memory_space<smem>>
      memref.store %47, %arg3[%c1] : memref<2xf32, #tpu.memory_space<smem>>
    } else {
    }
    return
  }
  func.func @transform_0(%arg0: i32) -> (i32, i32) {
    %c0_i32 = arith.constant 0 : i32
    %c0_i32_0 = arith.constant 0 : i32
    return %arg0, %c0_i32 : i32, i32
  }
  func.func @transform_1(%arg0: i32) -> (i32, i32) {
    %c0_i32 = arith.constant 0 : i32
    %c0_i32_0 = arith.constant 0 : i32
    return %arg0, %c0_i32 : i32, i32
  }
  func.func @transform_2(%arg0: i32) -> i32 {
    %c0_i32 = arith.constant 0 : i32
    %c0_i32_0 = arith.constant 0 : i32
    return %c0_i32 : i32
  }
}

</mosaic_0001>

<llo_original>
// kernel: tpu_custom_call.1
$region0: #{tpu_custom_call.1}
  #allocation0 [shape = 'u32[]', space=smem, size = 0x4, offset = 0x4, fixed_abs, tag = 'smem constant byte address 0x4 - core index']
  #allocation1 [shape = 'u32[144,128]{1,0:T(1,128)}', space=vmem, size = 0x12000, scoped, tag = 'internal scratch']
  #allocation2 [shape = 'f32[16,128]{1,0:T(8,128)}', space=vmem, size = 0x2000, scoped, tag = 'scratch operand']
  #allocation3 [shape = 'f32[16,128]{1,0:T(8,128)}', space=vmem, size = 0x2000, scoped, tag = 'scratch operand']
  %s0 = inlined_call_operand.hbm [shape: f32[16,128], index: 0, kind: input, shape index: {}]
  %s1 = inlined_call_operand.hbm [shape: f32[16,128], index: 1, kind: input, shape index: {}]
  %s2 = inlined_call_operand.hbm [shape: f32[2], index: 2, kind: output, shape index: {}]
  %s3 = sld [smem:[#allocation0]]
  $region34: #{tpu_custom_call.1} parent=0
    _
  %s5 = ssub.s32 1, %s3
  %s6 = scalar_select 0, %s5, %s3
  $region1: #{tpu_custom_call.1} parent=0
    #allocation4 [shape = 'u8[8192]{0}', space=vmem, size = 0x2000, scoped, tag = 'input window, operand 0, single buffered']
    #allocation5 [shape = 's32[1]{0}', space=sflag, size = 0x4, scoped, tag = 'scoped memory for tpu_custom_call.1']
    #allocation6 [shape = 's32[1]{0}', space=sflag, size = 0x4, scoped, tag = 'scoped memory for tpu_custom_call.1']
    #allocation7 [shape = 'u8[8192]{0}', space=vmem, size = 0x2000, scoped, tag = 'input window, operand 1, single buffered']
    #allocation8 [shape = 's32[1]{0}', space=sflag, size = 0x4, scoped, tag = 'scoped memory for tpu_custom_call.1']
    #allocation9 [shape = 'u8[512]{0}', space=smem, size = 0x200, scoped, tag = 'output window, operand 0, single buffered']
    %7 = vsyncpa [#allocation5], 0
    %8 = vsyncpa [#allocation8], 0
    %9 = vsyncpa [#allocation6], 0
    // Predicated region
    $region2: #{tpu_custom_call.1} parent=1 // pred_check
      _
    $region3: #{tpu_custom_call.1} parent=1 // pred_check_branch
      %11 = sbr.rel (0) target = $region5
    $region4: #{tpu_custom_call.1} parent=1 // pred_region
      %s13 = ssub.s32 256, 256
      %14 = vsyncadd [#allocation5], %s13
      %s15 = sshll.u32 [#allocation4], 4
      %s16 = int_to_ptr.vmem [resolvable:$true] %s15
      %21 = dma.hbm_to_vmem [thread:$0]  %s0, 256, %s16, [#allocation5], 128, 128, 8
    $region5: #{tpu_custom_call.1} parent=1 // pred_fallthru
      _
    // Predicated region
    $region6: #{tpu_custom_call.1} parent=1 // pred_check
      _
    $region7: #{tpu_custom_call.1} parent=1 // pred_check_branch
      %23 = sbr.rel (0) target = $region9
    $region8: #{tpu_custom_call.1} parent=1 // pred_region
      %s25 = ssub.s32 256, 256
      %26 = vsyncadd [#allocation8], %s25
      %s27 = sshll.u32 [#allocation7], 4
      %s28 = int_to_ptr.vmem [resolvable:$true] %s27
      %33 = dma.hbm_to_vmem [thread:$0]  %s1, 256, %s28, [#allocation8], 128, 128, 8
    $region9: #{tpu_custom_call.1} parent=1 // pred_fallthru
      _
    // Predicated region
    $region10: #{tpu_custom_call.1} parent=1 // pred_check
      _
    $region11: #{tpu_custom_call.1} parent=1 // pred_check_branch
      %35 = sbr.rel (0) target = $region13
    $region12: #{tpu_custom_call.1} parent=1 // pred_region
      %36 = dma.done [#allocation5], 256
    $region13: #{tpu_custom_call.1} parent=1 // pred_fallthru
      _
    // Predicated region
    $region14: #{tpu_custom_call.1} parent=1 // pred_check
      _
    $region15: #{tpu_custom_call.1} parent=1 // pred_check_branch
      %38 = sbr.rel (0) target = $region17
    $region16: #{tpu_custom_call.1} parent=1 // pred_region
      %39 = dma.done [#allocation8], 256
    $region17: #{tpu_custom_call.1} parent=1 // pred_fallthru
      _
    %p40 = scmp.eq.s32.totalorder 0, 0
    // Predicated region
    $region18: #{tpu_custom_call.1} parent=1 // pred_check
      %p41 = pneg %p40
    $region19: #{tpu_custom_call.1} parent=1 // pred_check_branch
      %43 = sbr.rel (%p41) target = $region21
    $region20: #{tpu_custom_call.1} parent=1 // pred_region
      %44 = vst [vmem:[#allocation2] sm:$0xff] 0.0
      %45 = vst [vmem:[#allocation2 + $0x8] sm:$0xff] 0.0
      %46 = vst [vmem:[#allocation3] sm:$0xff] 0.0
      %47 = vst [vmem:[#allocation3 + $0x8] sm:$0xff] 0.0
    $region21: #{tpu_custom_call.1} parent=1 // pred_fallthru
      _
    %v48 = vld [vmem:[#allocation4] sm:$0xff]
    %v49 = vld [vmem:[#allocation4 + $0x8] sm:$0xff]
    %v50 = vld [vmem:[#allocation7] sm:$0xff]
    %v51 = vld [vmem:[#allocation7 + $0x8] sm:$0xff]
    %v52 = vmul.f32 %v48, 0.5
    %v53 = vmul.f32 %v49, 0.5
    %v54 = vtanh.pop %v52
    %v55 = vtanh.pop %v53
    %v56 = vadd.f32 %v54, 1.0
    %v57 = vadd.f32 %v55, 1.0
    %v58 = vmul.f32 %v56, 0.5
    %v59 = vmul.f32 %v57, 0.5
    %v60 = vlaneseq
    %v61 = vshrl.u32 %v60, 7
    %v62 = vadd.s32 %v61, 8
    %v63 = vlaneseq
    %v64 = vand.u32 %v63, 127
    %s65 = smul.u32 0, 16
    %v66 = vstv %s65
    %v67 = vadd.s32 %v66, %v61
    %v68 = vadd.s32 %v66, %v62
    %v69 = vmul.u32 %v67, 128
    %v70 = vmul.u32 %v68, 128
    %v71 = vadd.s32 %v69, %v64
    %v72 = vadd.s32 %v70, %v64
    %vm73 = vcmp.lt.s32.totalorder %v71, 2048
    %vm74 = vcmp.lt.s32.totalorder %v72, 2048
    %v75 = vsel %vm73, %v58, 0.0
    %v76 = vsel %vm74, %v59, 0.0
    %v77 = vsel %vm73, %v50, 0.0
    %v78 = vsel %vm74, %v51, 0.0
    %v79 = vld [vmem:[#allocation2] sm:$0xff]
    %v80 = vld [vmem:[#allocation2 + $0x8] sm:$0xff]
    %v81 = vmul.f32 %v75, %v77
    %v82 = vmul.f32 %v76, %v78
    %v83 = vadd.f32 %v79, %v81
    %v84 = vadd.f32 %v80, %v82
    %85 = vst [vmem:[#allocation2] sm:$0xff] %v83
    %86 = vst [vmem:[#allocation2 + $0x8] sm:$0xff] %v84
    %v87 = vld [vmem:[#allocation3] sm:$0xff]
    %v88 = vld [vmem:[#allocation3 + $0x8] sm:$0xff]
    %v89 = vadd.f32 %v75, %v77
    %v90 = vadd.f32 %v76, %v78
    %v91 = vadd.f32 %v87, %v89
    %v92 = vadd.f32 %v88, %v90
    %93 = vst [vmem:[#allocation3] sm:$0xff] %v91
    %94 = vst [vmem:[#allocation3 + $0x8] sm:$0xff] %v92
    // Predicated region
    $region22: #{tpu_custom_call.1} parent=1 // pred_check
      %p95 = pneg %p40
    $region23: #{tpu_custom_call.1} parent=1 // pred_check_branch
      %97 = sbr.rel (%p95) target = $region25
    $region24: #{tpu_custom_call.1} parent=1 // pred_region
      %v98 = vld [vmem:[#allocation2] sm:$0xff]
      %v99 = vld [vmem:[#allocation2 + $0x8] sm:$0xff]
      %v100 = vadd.f32 %v98, %v99
      %101 = vadd.xlane.f32.xlu0 %v100
      %v102 = vpop.xlane.xlu0 %101
      %v103 = vrot.slane %v102, 4
      %v104 = vadd.f32 %v102, %v103
      %v105 = vrot.slane %v104, 2
      %v106 = vadd.f32 %v104, %v105
      %v107 = vrot.slane %v106, 1
      %v108 = vadd.f32 %v106, %v107
      %s109 = vtos %v108
      %s110 = scalar_lea.smem [#allocation9], 0
      %111 = sst [smem:[%s110]] %s109
      %v112 = vld [vmem:[#allocation3] sm:$0xff]
      %v113 = vld [vmem:[#allocation3 + $0x8] sm:$0xff]
      %v114 = vadd.f32 %v112, %v113
      %115 = vadd.xlane.f32.xlu0 %v114
      %v116 = vpop.xlane.xlu0 %115
      %v117 = vrot.slane %v116, 4
      %v118 = vadd.f32 %v116, %v117
      %v119 = vrot.slane %v118, 2
      %v120 = vadd.f32 %v118, %v119
      %v121 = vrot.slane %v120, 1
      %v122 = vadd.f32 %v120, %v121
      %s123 = vtos %v122
      %s124 = scalar_lea.smem [#allocation9], 1
      %125 = sst [smem:[%s124]] %s123
    $region25: #{tpu_custom_call.1} parent=1 // pred_fallthru
      _
    // Predicated region
    $region26: #{tpu_custom_call.1} parent=1 // pred_check
      _
    $region27: #{tpu_custom_call.1} parent=1 // pred_check_branch
      %127 = sbr.rel (0) target = $region29
    $region28: #{tpu_custom_call.1} parent=1 // pred_region
      %s129 = ssub.s32 16, 16
      %130 = vsyncadd [#allocation6], %s129
      %133 = dma.smem_to_hbm [#allocation9], 16, %s2, [#allocation6]
    $region29: #{tpu_custom_call.1} parent=1 // pred_fallthru
      _
    // Predicated region
    $region30: #{tpu_custom_call.1} parent=1 // pred_check
      _
    $region31: #{tpu_custom_call.1} parent=1 // pred_check_branch
      %135 = sbr.rel (0) target = $region33
    $region32: #{tpu_custom_call.1} parent=1 // pred_region
      %136 = dma.done [#allocation6], 16
    $region33: #{tpu_custom_call.1} parent=1 // pred_fallthru
      _
    %137 = sfence
    %138 = vsyncpa [#allocation5], 1
    %139 = vsyncpa [#allocation8], 1
    %140 = vsyncpa [#allocation6], 1

</llo_original>
